<compile_context>
chip_gen: v7x
topology: tpu7x:2x2x1
jax: 0.10.0
libtpu: 0.0.40
codegen_flags: <defaults>
</compile_context>

<pallas_src>
import functools

import jax
import jax.numpy as jnp
from jax.experimental import pallas as pl
from jax.experimental.pallas import tpu as pltpu


def _linear_pred_kernel(x_ref, w1_ref, b1_ref, w2_ref, b2_ref, o_ref):
    # x_ref:  [bb, P*D_in*L_in]
    # w1_ref: [P*D_in*L_in, P*L_out*D_in],   b1_ref: [1, P*L_out*D_in]
    # w2_ref: [P*L_out*D_in, P*L_out*D_out], b2_ref: [1, P*L_out*D_out]
    # o_ref:  [bb, P*L_out*D_out]
    h = jnp.dot(x_ref[...], w1_ref[...], preferred_element_type=jnp.float32)
    h = jnp.maximum(h + b1_ref[...], 0.0)
    y = jnp.dot(h, w2_ref[...], preferred_element_type=jnp.float32)
    o_ref[...] = (y + b2_ref[...]).astype(o_ref.dtype)


def _expand_params(w1, b1, w2, b2, pack):
    """Fold transpose(1,2) into block-diagonal weights; optionally pack P samples/row.

    Returns (w1big, b1rep, w2big, b2rep) such that for a packed row
    xrow = concat_p [x[p].reshape(D_in*L_in)]:
      relu(xrow @ w1big + b1rep) @ w2big + b2rep
        == concat_p [ (relu(x[p] @ W1^T + b1).T @ W2^T + b2).reshape(L_out*D_out) ]
    """
    L_out, L_in = w1.shape
    D_out, D_in = w2.shape
    f32 = jnp.float32
    K1, N1, N2 = D_in * L_in, L_out * D_in, L_out * D_out

    # W1big[(d,i), (l,d')] = W1[l,i] * [d==d']
    w1big = jnp.einsum("li,de->dile", w1.astype(f32),
                       jnp.eye(D_in, dtype=f32)).reshape(K1, N1)
    # W2big[(l,d), (l',o)] = W2[o,d] * [l==l']
    w2big = jnp.einsum("od,lm->ldmo", w2.astype(f32),
                       jnp.eye(L_out, dtype=f32)).reshape(N1, N2)
    b1rep = jnp.repeat(b1.astype(f32), D_in).reshape(1, N1)   # b1rep[l*D_in+d] = b1[l]
    b2rep = jnp.tile(b2.astype(f32), L_out).reshape(1, N2)    # b2rep[l*D_out+o] = b2[o]

    if pack > 1:
        # Block-diagonal over P independent samples sharing one GEMM row.
        eyep = jnp.eye(pack, dtype=f32)
        w1big = jnp.einsum("pq,kn->pkqn", eyep, w1big).reshape(pack * K1, pack * N1)
        w2big = jnp.einsum("pq,kn->pkqn", eyep, w2big).reshape(pack * N1, pack * N2)
        b1rep = jnp.tile(b1rep, (1, pack))
        b2rep = jnp.tile(b2rep, (1, pack))

    return w1big, b1rep, w2big, b2rep


def _pick_block(b_rows, target_steps):
    """Largest-utility batch block: divides b_rows (no padding), multiple of 8
    unless it covers the full batch, and yields ~target_steps grid steps."""
    if target_steps <= 1 or b_rows <= 8:
        return b_rows
    tgt = -(-b_rows // target_steps)          # ceil(b_rows / target_steps)
    for bb in range(tgt, b_rows):
        if b_rows % bb == 0 and bb % 8 == 0:
            return bb
    return b_rows                             # fall back to one full-batch step


def _linear_pred_call(x_flat, w1p, b1p, w2p, b2p, out_dtype, target_steps):
    b_rows, kp = x_flat.shape
    n1p = w1p.shape[1]
    n2p = w2p.shape[1]
    bb = _pick_block(b_rows, target_steps)
    grid_b = b_rows // bb

    return pl.pallas_call(
        _linear_pred_kernel,
        out_shape=jax.ShapeDtypeStruct((b_rows, n2p), out_dtype),
        grid_spec=pltpu.PrefetchScalarGridSpec(
            num_scalar_prefetch=0,
            grid=(grid_b,),
            in_specs=[
                pl.BlockSpec((bb, kp), lambda i: (i, 0)),    # x slab (batch-blocked)
                pl.BlockSpec((kp, n1p), lambda i: (0, 0)),   # W1big (grid-invariant)
                pl.BlockSpec((1, n1p), lambda i: (0, 0)),    # b1 row
                pl.BlockSpec((n1p, n2p), lambda i: (0, 0)),  # W2big (grid-invariant)
                pl.BlockSpec((1, n2p), lambda i: (0, 0)),    # b2 row
            ],
            out_specs=pl.BlockSpec((bb, n2p), lambda i: (i, 0)),
        ),
        compiler_params=pltpu.CompilerParams(
            dimension_semantics=("parallel",),   # shards the 2 steps on v7x's 2 TCs
            vmem_limit_bytes=32 * 1024 * 1024,
        ),
    )(x_flat, w1p, b1p, w2p, b2p)


def make_linear_pred(w1, b1, w2, b2, *, pack=2, target_steps=2):
    """Build fwd(x): [B, D_in, L_in] -> [B, L_out, D_out] (LinearPred.forward).

    Expanded weights are computed ONCE here (hoisted out of the per-call path).
    pack: samples packed per GEMM row (lane density; exact).  target_steps: grid
    steps to aim for (2 feeds both v7x TensorCores; use 1 on 1-TC chips if
    latency-tuning).
    """
    L_out, L_in = w1.shape
    D_out, D_in = w2.shape

    expanded = {1: _expand_params(w1, b1, w2, b2, 1)}
    if pack > 1:
        expanded[pack] = _expand_params(w1, b1, w2, b2, pack)

    @functools.partial(jax.jit, static_argnames=("p",))
    def _fwd(x, w1p, b1p, w2p, b2p, *, p):
        B = x.shape[0]
        # Row-major flatten (+ optional P-sample packing) is a free reshape.
        x_flat = x.reshape(B // p, p * D_in * L_in)
        out = _linear_pred_call(x_flat, w1p, b1p, w2p, b2p, x.dtype, target_steps)
        # [B//p, p*L_out*D_out] -> [B, L_out, D_out] is a free contiguous reshape.
        return out.reshape(B, L_out, D_out)

    def fwd(x):
        p = pack if (pack > 1 and x.shape[0] % pack == 0) else 1
        return _fwd(x, *expanded[p], p=p)

    return fwd


def _ref_forward(x, w1, b1, w2, b2):
    y1 = jnp.maximum(jnp.einsum("bdl,ol->bdo", x, w1) + b1, 0.0)
    y1t = jnp.transpose(y1, (0, 2, 1))
    return jnp.einsum("bld,od->blo", y1t, w2) + b2


if __name__ == "__main__":
    # Small module dims; batch sized to exercise packing + batch-blocked grid
    # (B=512, pack=2 -> 256 packed rows, bb=128 -> 2 parallel grid steps).
    B, input_dims, input_len = 512, 4, 16
    output_dims, output_len = 6, 12

    key = jax.random.PRNGKey(0)
    kx, kw1, kb1, kw2, kb2 = jax.random.split(key, 5)

    x = jax.random.normal(kx, (B, input_dims, input_len), dtype=jnp.float32)

    # Deterministic PyTorch-style Linear init: U(-1/sqrt(fan_in), 1/sqrt(fan_in)).
    bound1 = 1.0 / (input_len ** 0.5)
    w1 = jax.random.uniform(kw1, (output_len, input_len), jnp.float32,
                            -bound1, bound1)
    b1 = jax.random.uniform(kb1, (output_len,), jnp.float32, -bound1, bound1)

    bound2 = 1.0 / (input_dims ** 0.5)
    w2 = jax.random.uniform(kw2, (output_dims, input_dims), jnp.float32,
                            -bound2, bound2)
    b2 = jax.random.uniform(kb2, (output_dims,), jnp.float32, -bound2, bound2)

    # Weight expansion hoisted to parameter-load time; per-call path is just
    # reshape -> pallas_call -> reshape.
    fwd = make_linear_pred(w1, b1, w2, b2, pack=2, target_steps=2)

    out = jax.block_until_ready(fwd(x))
    ref = jax.block_until_ready(_ref_forward(x, w1, b1, w2, b2))

    assert out.shape == (B, output_len, output_dims), out.shape
    assert jnp.allclose(out, ref, atol=1e-4, rtol=1e-4), "mismatch vs reference"

    print("KERNEL_OK")
</pallas_src>

<mosaic_0001>
module attributes {stable_mosaic.version = 11 : i64} {
  func.func @_linear_pred_kernel(%arg0: i32, %arg1: memref<128x128xf32, #tpu.memory_space<vmem>>, %arg2: memref<128x96xf32, #tpu.memory_space<vmem>>, %arg3: memref<1x96xf32, #tpu.memory_space<vmem>>, %arg4: memref<96x144xf32, #tpu.memory_space<vmem>>, %arg5: memref<1x144xf32, #tpu.memory_space<vmem>>, %arg6: memref<128x144xf32, #tpu.memory_space<vmem>>) attributes {dimension_semantics = [#tpu.dimension_semantics<parallel>], iteration_bounds = array<i64: 2>, scalar_prefetch = 0 : i64, scratch_operands = 0 : i64, tpu.core_type = #tpu.core_type<tc>, window_params = [{transform_indices = @transform_0, window_bounds = array<i64: 128, 128>}, {pipeline_mode = #tpu.pipeline_mode<synchronous>, transform_indices = @transform_1, window_bounds = array<i64: 128, 96>}, {pipeline_mode = #tpu.pipeline_mode<synchronous>, transform_indices = @transform_2, window_bounds = array<i64: 1, 96>}, {pipeline_mode = #tpu.pipeline_mode<synchronous>, transform_indices = @transform_3, window_bounds = array<i64: 96, 144>}, {pipeline_mode = #tpu.pipeline_mode<synchronous>, transform_indices = @transform_4, window_bounds = array<i64: 1, 144>}, {transform_indices = @transform_5, window_bounds = array<i64: 128, 144>}]} {
    %c0 = arith.constant 0 : index
    %c0_0 = arith.constant 0 : index
    %0 = vector.load %arg1[%c0, %c0_0] : memref<128x128xf32, #tpu.memory_space<vmem>>, vector<128x128xf32>
    %c0_1 = arith.constant 0 : index
    %c0_2 = arith.constant 0 : index
    %1 = vector.load %arg2[%c0_1, %c0_2] : memref<128x96xf32, #tpu.memory_space<vmem>>, vector<128x96xf32>
    %cst = arith.constant dense<0.000000e+00> : vector<128x96xf32>
    %2 = tpu.matmul %0, %1, %cst {dimension_numbers = #tpu.dot_dimension_numbers<[1], [0], [0], [1], [0, 0, 1, 1], [], []>} : vector<128x128xf32>, vector<128x96xf32>, vector<128x96xf32> -> vector<128x96xf32>
    %c0_3 = arith.constant 0 : index
    %c0_4 = arith.constant 0 : index
    %3 = vector.load %arg3[%c0_3, %c0_4] : memref<1x96xf32, #tpu.memory_space<vmem>>, vector<1x96xf32>
    %4 = vector.broadcast %3 : vector<1x96xf32> to vector<128x96xf32>
    %5 = arith.addf %2, %4 : vector<128x96xf32>
    %cst_5 = arith.constant 0.000000e+00 : f32
    %6 = vector.broadcast %cst_5 : f32 to vector<128x96xf32>
    %7 = arith.maximumf %5, %6 : vector<128x96xf32>
    %c0_6 = arith.constant 0 : index
    %c0_7 = arith.constant 0 : index
    %8 = vector.load %arg4[%c0_6, %c0_7] : memref<96x144xf32, #tpu.memory_space<vmem>>, vector<96x144xf32>
    %cst_8 = arith.constant dense<0.000000e+00> : vector<128x144xf32>
    %9 = tpu.matmul %7, %8, %cst_8 {dimension_numbers = #tpu.dot_dimension_numbers<[1], [0], [0], [1], [0, 0, 1, 1], [], []>} : vector<128x96xf32>, vector<96x144xf32>, vector<128x144xf32> -> vector<128x144xf32>
    %c0_9 = arith.constant 0 : index
    %c0_10 = arith.constant 0 : index
    %10 = vector.load %arg5[%c0_9, %c0_10] : memref<1x144xf32, #tpu.memory_space<vmem>>, vector<1x144xf32>
    %11 = vector.broadcast %10 : vector<1x144xf32> to vector<128x144xf32>
    %12 = arith.addf %9, %11 : vector<128x144xf32>
    %c0_11 = arith.constant 0 : index
    %c0_12 = arith.constant 0 : index
    %13 = vector.load %arg6[%c0_11, %c0_12] : memref<128x144xf32, #tpu.memory_space<vmem>>, vector<128x144xf32>
    tpu.vector_store %arg6[%c0_11, %c0_12], %12 {strides = array<i32>} : memref<128x144xf32, #tpu.memory_space<vmem>>, vector<128x144xf32>,
    return
  }
  func.func @transform_0(%arg0: i32) -> (i32, i32) {
    %c0_i32 = arith.constant 0 : i32
    %c0_i32_0 = arith.constant 0 : i32
    return %arg0, %c0_i32 : i32, i32
  }
  func.func @transform_1(%arg0: i32) -> (i32, i32) {
    %c0_i32 = arith.constant 0 : i32
    %c0_i32_0 = arith.constant 0 : i32
    %c0_i32_1 = arith.constant 0 : i32
    return %c0_i32, %c0_i32_0 : i32, i32
  }
  func.func @transform_2(%arg0: i32) -> (i32, i32) {
    %c0_i32 = arith.constant 0 : i32
    %c0_i32_0 = arith.constant 0 : i32
    %c0_i32_1 = arith.constant 0 : i32
    return %c0_i32, %c0_i32_0 : i32, i32
  }
  func.func @transform_3(%arg0: i32) -> (i32, i32) {
    %c0_i32 = arith.constant 0 : i32
    %c0_i32_0 = arith.constant 0 : i32
    %c0_i32_1 = arith.constant 0 : i32
    return %c0_i32, %c0_i32_0 : i32, i32
  }
  func.func @transform_4(%arg0: i32) -> (i32, i32) {
    %c0_i32 = arith.constant 0 : i32
    %c0_i32_0 = arith.constant 0 : i32
    %c0_i32_1 = arith.constant 0 : i32
    return %c0_i32, %c0_i32_0 : i32, i32
  }
  func.func @transform_5(%arg0: i32) -> (i32, i32) {
    %c0_i32 = arith.constant 0 : i32
    %c0_i32_0 = arith.constant 0 : i32
    return %arg0, %c0_i32 : i32, i32
  }
}

</mosaic_0001>

<llo_original>
// kernel: _fwd.1
$region0: #{_fwd.1}
  #allocation0 [shape = 'u32[]', space=smem, size = 0x4, offset = 0x4, fixed_abs, tag = 'smem constant byte address 0x4 - core index']
  #allocation1 [shape = 'u32[144,128]{1,0:T(1,128)}', space=vmem, size = 0x12000, scoped, tag = 'internal scratch']
  %s0 = inlined_call_operand.vmem [shape: f32[256,128], index: 0, kind: input, shape index: {}]
  %s1 = inlined_call_operand.vmem [shape: f32[128,96], index: 1, kind: input, shape index: {}]
  %s2 = inlined_call_operand.hbm [shape: f32[1,96], index: 2, kind: input, shape index: {}]
  %s3 = inlined_call_operand.vmem [shape: f32[96,144], index: 3, kind: input, shape index: {}]
  %s4 = inlined_call_operand.hbm [shape: f32[1,144], index: 4, kind: input, shape index: {}]
  %s5 = inlined_call_operand.vmem [shape: f32[256,144], index: 5, kind: output, shape index: {}]
  %s6 = sld [smem:[#allocation0]]
  $region61: #{_fwd.1} parent=0
    _
  %s8 = ssub.s32 1, %s6
  %s9 = scalar_select 0, %s8, %s6
  $region1: #{_fwd.1} parent=0
    #allocation2 [shape = 'u8[512]{0}', space=vmem, size = 0x400, scoped, tag = 'input window, operand 2, single buffered']
    #allocation3 [shape = 's32[2]{0}', space=sflag, size = 0x8, scoped, tag = 'scoped memory for _fwd.1']
    #allocation4 [shape = 'u8[1024]{0}', space=vmem, size = 0x400, scoped, tag = 'input window, operand 4, single buffered']
    #allocation5 [shape = 's32[1]{0}', space=sflag, size = 0x4, scoped, tag = 'scoped memory for _fwd.1']
    %10 = vsyncpa [#allocation3], 0
    %11 = vsyncpa [#allocation5], 0
    loop: start=0, step=1, limit=4
    $region2: #{_fwd.1} parent=1 // loop_pre_header
      _
    $region3: #{_fwd.1} parent=1 // loop_header
      %s13 = sphi 0, %s17
      %p14 = scmp.ge.s32.totalorder %s13, 4
      %s23 = sphi 0, %s25
      %s26 = sphi 0, %s23
      %s27 = sphi 0, %s26
      %s43 = sphi 0, %s27
      %s47 = sphi 0, %s47
      %s49 = sphi 0, %s47
      %s50 = sphi 0, %s49
      %s64 = sphi 0, %s50
      %s68 = sphi 0, %s68
      %s70 = sphi 0, %s68
      %s71 = sphi 0, %s70
      %s85 = sphi 0, %s71
      %s89 = sphi 0, %s89
      %s91 = sphi 0, %s89
      %s92 = sphi 0, %s91
      %s106 = sphi 0, %s92
      %s110 = sphi 0, %s110
      %s112 = sphi 0, %s110
      %s113 = sphi 0, %s112
      %s127 = sphi 0, %s113
      %s133 = sphi 0, %s135
      %s136 = sphi 0, %s133
      %s137 = sphi 0, %s136
      %s153 = sphi 0, %s137
    $region4: #{_fwd.1} parent=1 // loop_header_branch
      %16 = sbr.rel (%p14) target = $region8
    $region5: #{_fwd.1} parent=1 // loop_body
      %s18 = ssub.s32 %s13, 1
      %s19 = ssub.s32 %s13, 2
      %s20 = sadd.s32 %s13, 1
      %s21 = ssub.s32 %s13, %s20
      %p22 = scmp.eq.s32.totalorder %s21, 0
      %s24 = sadd.s32 %s23, 1
      %s25 = scalar_select %p22, %s23, %s24
      %p28 = pneg %p22
      %p29 = scmp.eq.s32.totalorder %s13, 1
      %p30 = por %p28, %p29
      %p31 = scmp.ne.s32.totalorder %s23, %s26
      %p32 = scmp.eq.s32.totalorder %s13, 0
      %p33 = por %p31, %p32
      %p34 = scmp.ne.s32.totalorder %s23, %s26
      %p35 = scmp.eq.s32.totalorder %s18, 1
      %p36 = por %p34, %p35
      %p37 = scmp.ne.s32.totalorder %s26, %s27
      %p38 = scmp.eq.s32.totalorder %s18, 0
      %p39 = por %p37, %p38
      %p40 = scmp.ne.s32.totalorder %s26, %s27
      %p41 = scmp.eq.s32.totalorder %s19, 1
      %p42 = por %p40, %p41
      %p44 = scmp.ne.s32.totalorder %s27, %s43
      %p45 = scmp.eq.s32.totalorder %s19, 0
      %p46 = por %p44, %p45
      %s48 = sadd.s32 %s47, 1
      %p51 = scmp.eq.s32.totalorder %s13, 1
      %p52 = scmp.ne.s32.totalorder %s47, %s49
      %p53 = scmp.eq.s32.totalorder %s13, 0
      %p54 = por %p52, %p53
      %p55 = scmp.ne.s32.totalorder %s47, %s49
      %p56 = scmp.eq.s32.totalorder %s18, 1
      %p57 = por %p55, %p56
      %p58 = scmp.ne.s32.totalorder %s49, %s50
      %p59 = scmp.eq.s32.totalorder %s18, 0
      %p60 = por %p58, %p59
      %p61 = scmp.ne.s32.totalorder %s49, %s50
      %p62 = scmp.eq.s32.totalorder %s19, 1
      %p63 = por %p61, %p62
      %p65 = scmp.ne.s32.totalorder %s50, %s64
      %p66 = scmp.eq.s32.totalorder %s19, 0
      %p67 = por %p65, %p66
      %s69 = sadd.s32 %s68, 1
      %p72 = scmp.eq.s32.totalorder %s13, 1
      %p73 = scmp.ne.s32.totalorder %s68, %s70
      %p74 = scmp.eq.s32.totalorder %s13, 0
      %p75 = por %p73, %p74
      %p76 = scmp.ne.s32.totalorder %s68, %s70
      %p77 = scmp.eq.s32.totalorder %s18, 1
      %p78 = por %p76, %p77
      %p79 = scmp.ne.s32.totalorder %s70, %s71
      %p80 = scmp.eq.s32.totalorder %s18, 0
      %p81 = por %p79, %p80
      %p82 = scmp.ne.s32.totalorder %s70, %s71
      %p83 = scmp.eq.s32.totalorder %s19, 1
      %p84 = por %p82, %p83
      %p86 = scmp.ne.s32.totalorder %s71, %s85
      %p87 = scmp.eq.s32.totalorder %s19, 0
      %p88 = por %p86, %p87
      %s90 = sadd.s32 %s89, 1
      %p93 = scmp.eq.s32.totalorder %s13, 1
      %p94 = scmp.ne.s32.totalorder %s89, %s91
      %p95 = scmp.eq.s32.totalorder %s13, 0
      %p96 = por %p94, %p95
      %p97 = scmp.ne.s32.totalorder %s89, %s91
      %p98 = scmp.eq.s32.totalorder %s18, 1
      %p99 = por %p97, %p98
      %p100 = scmp.ne.s32.totalorder %s91, %s92
      %p101 = scmp.eq.s32.totalorder %s18, 0
      %p102 = por %p100, %p101
      %p103 = scmp.ne.s32.totalorder %s91, %s92
      %p104 = scmp.eq.s32.totalorder %s19, 1
      %p105 = por %p103, %p104
      %p107 = scmp.ne.s32.totalorder %s92, %s106
      %p108 = scmp.eq.s32.totalorder %s19, 0
      %p109 = por %p107, %p108
      %s111 = sadd.s32 %s110, 1
      %p114 = scmp.eq.s32.totalorder %s13, 1
      %p115 = scmp.ne.s32.totalorder %s110, %s112
      %p116 = scmp.eq.s32.totalorder %s13, 0
      %p117 = por %p115, %p116
      %p118 = scmp.ne.s32.totalorder %s110, %s112
      %p119 = scmp.eq.s32.totalorder %s18, 1
      %p120 = por %p118, %p119
      %p121 = scmp.ne.s32.totalorder %s112, %s113
      %p122 = scmp.eq.s32.totalorder %s18, 0
      %p123 = por %p121, %p122
      %p124 = scmp.ne.s32.totalorder %s112, %s113
      %p125 = scmp.eq.s32.totalorder %s19, 1
      %p126 = por %p124, %p125
      %p128 = scmp.ne.s32.totalorder %s113, %s127
      %p129 = scmp.eq.s32.totalorder %s19, 0
      %p130 = por %p128, %p129
      %s131 = ssub.s32 %s13, %s20
      %p132 = scmp.eq.s32.totalorder %s131, 0
      %s134 = sadd.s32 %s133, 1
      %s135 = scalar_select %p132, %s133, %s134
      %p138 = pneg %p132
      %p139 = scmp.eq.s32.totalorder %s13, 1
      %p140 = por %p138, %p139
      %p141 = scmp.ne.s32.totalorder %s133, %s136
      %p142 = scmp.eq.s32.totalorder %s13, 0
      %p143 = por %p141, %p142
      %p144 = scmp.ne.s32.totalorder %s133, %s136
      %p145 = scmp.eq.s32.totalorder %s18, 1
      %p146 = por %p144, %p145
      %p147 = scmp.ne.s32.totalorder %s136, %s137
      %p148 = scmp.eq.s32.totalorder %s18, 0
      %p149 = por %p147, %p148
      %p150 = scmp.ne.s32.totalorder %s136, %s137
      %p151 = scmp.eq.s32.totalorder %s19, 1
      %p152 = por %p150, %p151
      %p154 = scmp.ne.s32.totalorder %s137, %s153
      %p155 = scmp.eq.s32.totalorder %s19, 0
      %p156 = por %p154, %p155
      %p157 = scmp.le.s32.totalorder 1, %s13
      %p158 = scmp.lt.s32.totalorder %s13, 3
      %p159 = pnand %p157, %p158
      %p160 = pneg %p159
      // Predicated region
      $region9: #{_fwd.1} parent=5 // pred_check
        _
      $region10: #{_fwd.1} parent=5 // pred_check_branch
        %162 = sbr.rel (%p159) target = $region12
      $region11: #{_fwd.1} parent=5 // pred_region
        %s163 = ssub.s32 %s13, 1
        // Predicated region
        $region13: #{_fwd.1} parent=11 // pred_check
          %p164 = pneg %p60
        $region14: #{_fwd.1} parent=11 // pred_check_branch
          %166 = sbr.rel (%p164) target = $region16
        $region15: #{_fwd.1} parent=11 // pred_region
          _
        $region16: #{_fwd.1} parent=11 // pred_fallthru
          _
        // Predicated region
        $region17: #{_fwd.1} parent=11 // pred_check
          %p167 = pneg %p81
        $region18: #{_fwd.1} parent=11 // pred_check_branch
          %169 = sbr.rel (%p167) target = $region20
        $region19: #{_fwd.1} parent=11 // pred_region
          %s171 = ssub.s32 16, 16
          %172 = vsyncadd [#allocation3], %s171
          %s174 = sshll.u32 [#allocation2], 4
          %s175 = int_to_ptr.vmem [resolvable:$true] %s174
          %177 = dma.hbm_to_vmem [thread:$0]  %s2, 16, %s175, [#allocation3]
        $region20: #{_fwd.1} parent=11 // pred_fallthru
          _
        // Predicated region
        $region21: #{_fwd.1} parent=11 // pred_check
          %p178 = pneg %p102
        $region22: #{_fwd.1} parent=11 // pred_check_branch
          %180 = sbr.rel (%p178) target = $region24
        $region23: #{_fwd.1} parent=11 // pred_region
          _
        $region24: #{_fwd.1} parent=11 // pred_fallthru
          _
        // Predicated region
        $region25: #{_fwd.1} parent=11 // pred_check
          %p181 = pneg %p123
        $region26: #{_fwd.1} parent=11 // pred_check_branch
          %183 = sbr.rel (%p181) target = $region28
        $region27: #{_fwd.1} parent=11 // pred_region
          %s185 = ssub.s32 32, 32
          %186 = vsyncadd [#allocation5], %s185
          %s188 = sshll.u32 [#allocation4], 4
          %s189 = int_to_ptr.vmem [resolvable:$true] %s188
          %191 = dma.hbm_to_vmem [thread:$0]  %s4, 32, %s189, [#allocation5]
        $region28: #{_fwd.1} parent=11 // pred_fallthru
          _
      $region12: #{_fwd.1} parent=5 // pred_fallthru
        _
      %p192 = scmp.lt.s32.totalorder %s13, 2
      // Predicated region
      $region29: #{_fwd.1} parent=5 // pred_check
        %p193 = pneg %p192
      $region30: #{_fwd.1} parent=5 // pred_check_branch
        %195 = sbr.rel (%p193) target = $region32
      $region31: #{_fwd.1} parent=5 // pred_region
        // Predicated region
        $region33: #{_fwd.1} parent=31 // pred_check
          %p196 = pneg %p33
        $region34: #{_fwd.1} parent=31 // pred_check_branch
          %198 = sbr.rel (%p196) target = $region36
        $region35: #{_fwd.1} parent=31 // pred_region
          %s199 = smul.u32 16, %s13
          %p200 = scmp.lt.s32.totalorder %s199, 31
          %s201 = scalar_select %p200, %s199, 31
          %s202 = smul.addr %s201, 8
          %s203 = scalar_lea.vmem %s0, %s202
          %s204 = smul.u32 16, %s13
        $region36: #{_fwd.1} parent=31 // pred_fallthru
          _
      $region32: #{_fwd.1} parent=5 // pred_fallthru
        _
      %p205 = scmp.le.s32.totalorder 1, %s13
      %p206 = scmp.lt.s32.totalorder %s13, 3
      %p207 = pnand %p205, %p206
      %p208 = pneg %p207
      // Predicated region
      $region37: #{_fwd.1} parent=5 // pred_check
        _
      $region38: #{_fwd.1} parent=5 // pred_check_branch
        %210 = sbr.rel (%p207) target = $region40
      $region39: #{_fwd.1} parent=5 // pred_region
        %s211 = ssub.s32 %s13, 1
        // Predicated region
        $region41: #{_fwd.1} parent=39 // pred_check
          %p212 = pneg %p81
        $region42: #{_fwd.1} parent=39 // pred_check_branch
          %214 = sbr.rel (%p212) target = $region44
        $region43: #{_fwd.1} parent=39 // pred_region
          %215 = dma.done [#allocation3], 16
        $region44: #{_fwd.1} parent=39 // pred_fallthru
          _
        // Predicated region
        $region45: #{_fwd.1} parent=39 // pred_check
          %p216 = pneg %p123
        $region46: #{_fwd.1} parent=39 // pred_check_branch
          %218 = sbr.rel (%p216) target = $region48
        $region47: #{_fwd.1} parent=39 // pred_region
          %219 = dma.done [#allocation5], 32
        $region48: #{_fwd.1} parent=39 // pred_fallthru
          _
        %s220 = smul.u32 16, %s18
        %p221 = scmp.lt.s32.totalorder %s220, 31
        %s222 = scalar_select %p221, %s220, 31
        %s223 = smul.addr %s222, 8
        %s224 = scalar_lea.vmem %s0, %s223
        %p225 = pneg %p39
        %p226 = pneg %p36
        %p227 = pneg %p60
        %p228 = pneg %p57
        %p229 = pneg %p81
        %p230 = pneg %p78
        %p231 = pneg %p102
        %p232 = pneg %p99
        %p233 = pneg %p123
        %p234 = pneg %p120
        %p235 = pneg %p149
        %p236 = pneg %p146
        %s237 = smul.u32 16, %s18
        %p238 = scmp.lt.s32.totalorder %s237, 31
        %s239 = scalar_select %p238, %s237, 31
        %s240 = smul.addr %s239, 2
        %s241 = smul.addr %s240, 8
        %s242 = scalar_lea.vmem %s5, %s241
        %s243 = smul.u32 16, %s18
        %p244 = scmp.lt.s32.totalorder %s243, 31
        %s245 = scalar_select %p244, %s243, 31
        %s246 = smul.addr %s245, 8
        %s247 = scalar_lea.vmem %s0, %s246
        %s248 = smul.u32 16, %s18
        %s249 = smul.u32 16, %s18
        %p250 = scmp.lt.s32.totalorder %s249, 31
        %s251 = scalar_select %p250, %s249, 31
        %s252 = smul.addr %s251, 2
        %s253 = smul.addr %s252, 8
        %s254 = scalar_lea.vmem %s5, %s253
        %s255 = smul.u32 16, %s18
        %v256 = vld [vmem:[%s247] sm:$0xff]
        %v257 = vld [vmem:[%s247 + $0x8] sm:$0xff]
        %v258 = vld [vmem:[%s247 + $0x10] sm:$0xff]
        %v259 = vld [vmem:[%s247 + $0x18] sm:$0xff]
        %v260 = vld [vmem:[%s247 + $0x20] sm:$0xff]
        %v261 = vld [vmem:[%s247 + $0x28] sm:$0xff]
        %v262 = vld [vmem:[%s247 + $0x30] sm:$0xff]
        %v263 = vld [vmem:[%s247 + $0x38] sm:$0xff]
        %v264 = vld [vmem:[%s247 + $0x40] sm:$0xff]
        %v265 = vld [vmem:[%s247 + $0x48] sm:$0xff]
        %v266 = vld [vmem:[%s247 + $0x50] sm:$0xff]
        %v267 = vld [vmem:[%s247 + $0x58] sm:$0xff]
        %v268 = vld [vmem:[%s247 + $0x60] sm:$0xff]
        %v269 = vld [vmem:[%s247 + $0x68] sm:$0xff]
        %v270 = vld [vmem:[%s247 + $0x70] sm:$0xff]
        %v271 = vld [vmem:[%s247 + $0x78] sm:$0xff]
        %v272 = vld [vmem:[%s1] sm:$0xff]
        %v273 = vld [vmem:[%s1 + $0x8] sm:$0xff]
        %v274 = vld [vmem:[%s1 + $0x10] sm:$0xff]
        %v275 = vld [vmem:[%s1 + $0x18] sm:$0xff]
        %v276 = vld [vmem:[%s1 + $0x20] sm:$0xff]
        %v277 = vld [vmem:[%s1 + $0x28] sm:$0xff]
        %v278 = vld [vmem:[%s1 + $0x30] sm:$0xff]
        %v279 = vld [vmem:[%s1 + $0x38] sm:$0xff]
        %v280 = vld [vmem:[%s1 + $0x40] sm:$0xff]
        %v281 = vld [vmem:[%s1 + $0x48] sm:$0xff]
        %v282 = vld [vmem:[%s1 + $0x50] sm:$0xff]
        %v283 = vld [vmem:[%s1 + $0x58] sm:$0xff]
        %v284 = vld [vmem:[%s1 + $0x60] sm:$0xff]
        %v285 = vld [vmem:[%s1 + $0x68] sm:$0xff]
        %v286 = vld [vmem:[%s1 + $0x70] sm:$0xff]
        %v287 = vld [vmem:[%s1 + $0x78] sm:$0xff]
        %v288 = vld [vmem:[#allocation2] sm:$0x1]
        %v290 = vlaneseq
        %v291 = vshrl.u32 %v290, 7
        %v292 = vsub.s32 0, %v291
        %v293 = vrot.slane %v288, %v292
        %295 = vmatprep.subr.mxu0 0.0
        %296 = vmatpush1.msra.mxu0 %v272
        %297 = vmatprep.subr.mxu0 0.0
        %298 = vmatpush1.msra.mxu0 %v273
        %299 = vmatprep.subr.mxu0 0.0
        %300 = vmatpush1.msra.mxu0 %v274
        %301 = vmatprep.subr.mxu0 0.0
        %302 = vmatpush1.msra.mxu0 %v275
        %303 = vmatprep.subr.mxu0 0.0
        %304 = vmatpush1.msra.mxu0 %v276
        %305 = vmatprep.subr.mxu0 0.0
        %306 = vmatpush1.msra.mxu0 %v277
        %307 = vmatprep.subr.mxu0 0.0
        %308 = vmatpush1.msra.mxu0 %v278
        %309 = vmatprep.subr.mxu0 0.0
        %310 = vmatpush1.msra.mxu0 %v279
        %311 = vmatprep.subr.mxu0 0.0
        %312 = vmatpush1.msra.mxu0 %v280
        %313 = vmatprep.subr.mxu0 0.0
        %314 = vmatpush1.msra.mxu0 %v281
        %315 = vmatprep.subr.mxu0 0.0
        %316 = vmatpush1.msra.mxu0 %v282
        %317 = vmatprep.subr.mxu0 0.0
        %318 = vmatpush1.msra.mxu0 %v283
        %319 = vmatprep.subr.mxu0 0.0
        %320 = vmatpush1.msra.mxu0 %v284
        %321 = vmatprep.subr.mxu0 0.0
        %322 = vmatpush1.msra.mxu0 %v285
        %323 = vmatprep.subr.mxu0 0.0
        %324 = vmatpush1.msra.mxu0 %v286
        %325 = vmatprep.subr.mxu0 0.0
        %326 = vmatpush1.msra.mxu0 %v287
        %327 = vmatprep.subr.mxu0 0.0
        %328 = vmatpush1.msra.mxu0 0.0
        %329 = vmatprep.subr.mxu0 0.0
        %330 = vmatpush1.msra.mxu0 0.0
        %331 = vmatprep.subr.mxu0 0.0
        %332 = vmatpush1.msra.mxu0 0.0
        %333 = vmatprep.subr.mxu0 0.0
        %334 = vmatpush1.msra.mxu0 0.0
        %335 = vmatprep.subr.mxu0 0.0
        %336 = vmatpush1.msra.mxu0 0.0
        %337 = vmatprep.subr.mxu0 0.0
        %338 = vmatpush1.msra.mxu0 0.0
        %339 = vmatprep.subr.mxu0 0.0
        %340 = vmatpush1.msra.mxu0 0.0
        %341 = vmatprep.subr.mxu0 0.0
        %342 = vmatpush1.msra.mxu0 0.0
        %343 = vmatprep.subr.mxu0 0.0
        %344 = vmatpush1.msra.mxu0 0.0
        %345 = vmatprep.subr.mxu0 0.0
        %346 = vmatpush1.msra.mxu0 0.0
        %347 = vmatprep.subr.mxu0 0.0
        %348 = vmatpush1.msra.mxu0 0.0
        %349 = vmatprep.subr.mxu0 0.0
        %350 = vmatpush1.msra.mxu0 0.0
        %351 = vmatprep.subr.mxu0 0.0
        %352 = vmatpush1.msra.mxu0 0.0
        %353 = vmatprep.subr.mxu0 0.0
        %354 = vmatpush1.msra.mxu0 0.0
        %355 = vmatprep.subr.mxu0 0.0
        %356 = vmatpush1.msra.mxu0 0.0
        %357 = vmatprep.subr.mxu0 0.0
        %358 = vmatpush1.msra.mxu0 0.0
        %359 = vmatprep.mubr.f32.mxu0 0.0
        %360 = vmatmul.mubr.f32.gmra.mrb[0].mxu0 %v256
        %v361 = vpop.f32.mrb[0].mxu0
        %v362 = vadd.f32 %v293, %v361
        %v363 = vpop.f32.mrb[0].mxu0
        %364 = vmatprep.mubr.f32.mxu0 0.0
        %365 = vmatmul.mubr.f32.gmra.mrb[0].mxu0 %v257
        %v366 = vpop.f32.mrb[0].mxu0
        %v367 = vadd.f32 %v293, %v366
        %v368 = vpop.f32.mrb[0].mxu0
        %369 = vmatprep.mubr.f32.mxu0 0.0
        %370 = vmatmul.mubr.f32.gmra.mrb[0].mxu0 %v258
        %v371 = vpop.f32.mrb[0].mxu0
        %v372 = vadd.f32 %v293, %v371
        %v373 = vpop.f32.mrb[0].mxu0
        %374 = vmatprep.mubr.f32.mxu0 0.0
        %375 = vmatmul.mubr.f32.gmra.mrb[0].mxu0 %v259
        %v376 = vpop.f32.mrb[0].mxu0
        %v377 = vadd.f32 %v293, %v376
        %v378 = vpop.f32.mrb[0].mxu0
        %379 = vmatprep.mubr.f32.mxu0 0.0
        %380 = vmatmul.mubr.f32.gmra.mrb[0].mxu0 %v260
        %v381 = vpop.f32.mrb[0].mxu0
        %v382 = vadd.f32 %v293, %v381
        %v383 = vpop.f32.mrb[0].mxu0
        %384 = vmatprep.mubr.f32.mxu0 0.0
        %385 = vmatmul.mubr.f32.gmra.mrb[0].mxu0 %v261
        %v386 = vpop.f32.mrb[0].mxu0
        %v387 = vadd.f32 %v293, %v386
        %v388 = vpop.f32.mrb[0].mxu0
        %389 = vmatprep.mubr.f32.mxu0 0.0
        %390 = vmatmul.mubr.f32.gmra.mrb[0].mxu0 %v262
        %v391 = vpop.f32.mrb[0].mxu0
        %v392 = vadd.f32 %v293, %v391
        %v393 = vpop.f32.mrb[0].mxu0
        %394 = vmatprep.mubr.f32.mxu0 0.0
        %395 = vmatmul.mubr.f32.gmra.mrb[0].mxu0 %v263
        %v396 = vpop.f32.mrb[0].mxu0
        %v397 = vadd.f32 %v293, %v396
        %v398 = vpop.f32.mrb[0].mxu0
        %399 = vmatprep.mubr.f32.mxu0 0.0
        %400 = vmatmul.mubr.f32.gmra.mrb[0].mxu0 %v264
        %v401 = vpop.f32.mrb[0].mxu0
        %v402 = vadd.f32 %v293, %v401
        %v403 = vpop.f32.mrb[0].mxu0
        %404 = vmatprep.mubr.f32.mxu0 0.0
        %405 = vmatmul.mubr.f32.gmra.mrb[0].mxu0 %v265
        %v406 = vpop.f32.mrb[0].mxu0
        %v407 = vadd.f32 %v293, %v406
        %v408 = vpop.f32.mrb[0].mxu0
        %409 = vmatprep.mubr.f32.mxu0 0.0
        %410 = vmatmul.mubr.f32.gmra.mrb[0].mxu0 %v266
        %v411 = vpop.f32.mrb[0].mxu0
        %v412 = vadd.f32 %v293, %v411
        %v413 = vpop.f32.mrb[0].mxu0
        %414 = vmatprep.mubr.f32.mxu0 0.0
        %415 = vmatmul.mubr.f32.gmra.mrb[0].mxu0 %v267
        %v416 = vpop.f32.mrb[0].mxu0
        %v417 = vadd.f32 %v293, %v416
        %v418 = vpop.f32.mrb[0].mxu0
        %419 = vmatprep.mubr.f32.mxu0 0.0
        %420 = vmatmul.mubr.f32.gmra.mrb[0].mxu0 %v268
        %v421 = vpop.f32.mrb[0].mxu0
        %v422 = vadd.f32 %v293, %v421
        %v423 = vpop.f32.mrb[0].mxu0
        %424 = vmatprep.mubr.f32.mxu0 0.0
        %425 = vmatmul.mubr.f32.gmra.mrb[0].mxu0 %v269
        %v426 = vpop.f32.mrb[0].mxu0
        %v427 = vadd.f32 %v293, %v426
        %v428 = vpop.f32.mrb[0].mxu0
        %429 = vmatprep.mubr.f32.mxu0 0.0
        %430 = vmatmul.mubr.f32.gmra.mrb[0].mxu0 %v270
        %v431 = vpop.f32.mrb[0].mxu0
        %v432 = vadd.f32 %v293, %v431
        %v433 = vpop.f32.mrb[0].mxu0
        %434 = vmatprep.mubr.f32.mxu0 0.0
        %435 = vmatmul.mubr.f32.gmra.mrb[0].mxu0 %v271
        %v436 = vpop.f32.mrb[0].mxu0
        %v437 = vadd.f32 %v293, %v436
        %v438 = vpop.f32.mrb[0].mxu0
        %439 = vdwg.mxu0
        %v440 = vmax.f32 %v362, 0.0
        %v441 = vmax.f32 %v367, 0.0
        %v442 = vmax.f32 %v372, 0.0
        %v443 = vmax.f32 %v377, 0.0
        %v444 = vmax.f32 %v382, 0.0
        %v445 = vmax.f32 %v387, 0.0
        %v446 = vmax.f32 %v392, 0.0
        %v447 = vmax.f32 %v397, 0.0
        %v448 = vmax.f32 %v402, 0.0
        %v449 = vmax.f32 %v407, 0.0
        %v450 = vmax.f32 %v412, 0.0
        %v451 = vmax.f32 %v417, 0.0
        %v452 = vmax.f32 %v422, 0.0
        %v453 = vmax.f32 %v427, 0.0
        %v454 = vmax.f32 %v432, 0.0
        %v455 = vmax.f32 %v437, 0.0
        %v456 = vld [vmem:[%s3] sm:$0xff]
        %v457 = vld [vmem:[%s3 + $0x8] sm:$0xff]
        %v458 = vld [vmem:[%s3 + $0x10] sm:$0xff]
        %v459 = vld [vmem:[%s3 + $0x18] sm:$0xff]
        %v460 = vld [vmem:[%s3 + $0x20] sm:$0xff]
        %v461 = vld [vmem:[%s3 + $0x28] sm:$0xff]
        %v462 = vld [vmem:[%s3 + $0x30] sm:$0xff]
        %v463 = vld [vmem:[%s3 + $0x38] sm:$0xff]
        %v464 = vld [vmem:[%s3 + $0x40] sm:$0xff]
        %v465 = vld [vmem:[%s3 + $0x48] sm:$0xff]
        %v466 = vld [vmem:[%s3 + $0x50] sm:$0xff]
        %v467 = vld [vmem:[%s3 + $0x58] sm:$0xff]
        %v468 = vld [vmem:[%s3 + $0x60] sm:$0xff]
        %v469 = vld [vmem:[%s3 + $0x68] sm:$0xff]
        %v470 = vld [vmem:[%s3 + $0x70] sm:$0xff]
        %v471 = vld [vmem:[%s3 + $0x78] sm:$0xff]
        %v472 = vld [vmem:[%s3 + $0x80] sm:$0xff]
        %v473 = vld [vmem:[%s3 + $0x88] sm:$0xff]
        %v474 = vld [vmem:[%s3 + $0x90] sm:$0xff]
        %v475 = vld [vmem:[%s3 + $0x98] sm:$0xff]
        %v476 = vld [vmem:[%s3 + $0xa0] sm:$0xff]
        %v477 = vld [vmem:[%s3 + $0xa8] sm:$0xff]
        %v478 = vld [vmem:[%s3 + $0xb0] sm:$0xff]
        %v479 = vld [vmem:[%s3 + $0xb8] sm:$0xff]
        %v480 = vld [vmem:[#allocation4] sm:$0x3]
        %v482 = vlaneseq
        %v483 = vshrl.u32 %v482, 7
        %v484 = vsub.s32 0, %v483
        %v485 = vrot.slane %v480, %v484
        %v486 = vlaneseq
        %v487 = vshrl.u32 %v486, 7
        %v488 = vsub.s32 1, %v487
        %v489 = vrot.slane %v480, %v488
        %vm492 = vcmask 785408
        %v494 = vsel %vm492, %v440, 0
        %v497 = vsel %vm492, %v441, 0
        %v500 = vsel %vm492, %v442, 0
        %v503 = vsel %vm492, %v443, 0
        %v506 = vsel %vm492, %v444, 0
        %v509 = vsel %vm492, %v445, 0
        %v512 = vsel %vm492, %v446, 0
        %v515 = vsel %vm492, %v447, 0
        %v518 = vsel %vm492, %v448, 0
        %v521 = vsel %vm492, %v449, 0
        %v524 = vsel %vm492, %v450, 0
        %v527 = vsel %vm492, %v451, 0
        %v530 = vsel %vm492, %v452, 0
        %v533 = vsel %vm492, %v453, 0
        %v536 = vsel %vm492, %v454, 0
        %v539 = vsel %vm492, %v455, 0
        %541 = vmatprep.subr.mxu0 %v457
        %542 = vmatpush1.msra.mxu0 %v456
        %543 = vmatprep.subr.mxu0 %v459
        %544 = vmatpush1.msra.mxu0 %v458
        %545 = vmatprep.subr.mxu0 %v461
        %546 = vmatpush1.msra.mxu0 %v460
        %547 = vmatprep.subr.mxu0 %v463
        %548 = vmatpush1.msra.mxu0 %v462
        %549 = vmatprep.subr.mxu0 %v465
        %550 = vmatpush1.msra.mxu0 %v464
        %551 = vmatprep.subr.mxu0 %v467
        %552 = vmatpush1.msra.mxu0 %v466
        %553 = vmatprep.subr.mxu0 %v469
        %554 = vmatpush1.msra.mxu0 %v468
        %555 = vmatprep.subr.mxu0 %v471
        %556 = vmatpush1.msra.mxu0 %v470
        %557 = vmatprep.subr.mxu0 %v473
        %558 = vmatpush1.msra.mxu0 %v472
        %559 = vmatprep.subr.mxu0 %v475
        %560 = vmatpush1.msra.mxu0 %v474
        %561 = vmatprep.subr.mxu0 %v477
        %562 = vmatpush1.msra.mxu0 %v476
        %563 = vmatprep.subr.mxu0 %v479
        %564 = vmatpush1.msra.mxu0 %v478
        %565 = vmatprep.subr.mxu0 0.0
        %566 = vmatpush1.msra.mxu0 0.0
        %567 = vmatprep.subr.mxu0 0.0
        %568 = vmatpush1.msra.mxu0 0.0
        %569 = vmatprep.subr.mxu0 0.0
        %570 = vmatpush1.msra.mxu0 0.0
        %571 = vmatprep.subr.mxu0 0.0
        %572 = vmatpush1.msra.mxu0 0.0
        %573 = vmatprep.subr.mxu0 0.0
        %574 = vmatpush1.msra.mxu0 0.0
        %575 = vmatprep.subr.mxu0 0.0
        %576 = vmatpush1.msra.mxu0 0.0
        %577 = vmatprep.subr.mxu0 0.0
        %578 = vmatpush1.msra.mxu0 0.0
        %579 = vmatprep.subr.mxu0 0.0
        %580 = vmatpush1.msra.mxu0 0.0
        %581 = vmatprep.subr.mxu0 0.0
        %582 = vmatpush1.msra.mxu0 0.0
        %583 = vmatprep.subr.mxu0 0.0
        %584 = vmatpush1.msra.mxu0 0.0
        %585 = vmatprep.subr.mxu0 0.0
        %586 = vmatpush1.msra.mxu0 0.0
        %587 = vmatprep.subr.mxu0 0.0
        %588 = vmatpush1.msra.mxu0 0.0
        %589 = vmatprep.subr.mxu0 0.0
        %590 = vmatpush1.msra.mxu0 0.0
        %591 = vmatprep.subr.mxu0 0.0
        %592 = vmatpush1.msra.mxu0 0.0
        %593 = vmatprep.subr.mxu0 0.0
        %594 = vmatpush1.msra.mxu0 0.0
        %595 = vmatprep.subr.mxu0 0.0
        %596 = vmatpush1.msra.mxu0 0.0
        %597 = vmatprep.subr.mxu0 0.0
        %598 = vmatpush1.msra.mxu0 0.0
        %599 = vmatprep.subr.mxu0 0.0
        %600 = vmatpush1.msra.mxu0 0.0
        %601 = vmatprep.subr.mxu0 0.0
        %602 = vmatpush1.msra.mxu0 0.0
        %603 = vmatprep.subr.mxu0 0.0
        %604 = vmatpush1.msra.mxu0 0.0
        %605 = vmatprep.mubr.f32.mxu0 0.0
        %606 = vmatmul.mubr.f32.gmra.mrb[0].mxu0 %v494
        %v607 = vpop.f32.mrb[0].mxu0
        %v608 = vadd.f32 %v485, %v607
        %v609 = vpop.f32.mrb[0].mxu0
        %v610 = vadd.f32 %v489, %v609
        %611 = vmatprep.mubr.f32.mxu0 0.0
        %612 = vmatmul.mubr.f32.gmra.mrb[0].mxu0 %v497
        %v613 = vpop.f32.mrb[0].mxu0
        %v614 = vadd.f32 %v485, %v613
        %v615 = vpop.f32.mrb[0].mxu0
        %v616 = vadd.f32 %v489, %v615
        %617 = vmatprep.mubr.f32.mxu0 0.0
        %618 = vmatmul.mubr.f32.gmra.mrb[0].mxu0 %v500
        %v619 = vpop.f32.mrb[0].mxu0
        %v620 = vadd.f32 %v485, %v619
        %v621 = vpop.f32.mrb[0].mxu0
        %v622 = vadd.f32 %v489, %v621
        %623 = vmatprep.mubr.f32.mxu0 0.0
        %624 = vmatmul.mubr.f32.gmra.mrb[0].mxu0 %v503
        %v625 = vpop.f32.mrb[0].mxu0
        %v626 = vadd.f32 %v485, %v625
        %v627 = vpop.f32.mrb[0].mxu0
        %v628 = vadd.f32 %v489, %v627
        %629 = vmatprep.mubr.f32.mxu0 0.0
        %630 = vmatmul.mubr.f32.gmra.mrb[0].mxu0 %v506
        %v631 = vpop.f32.mrb[0].mxu0
        %v632 = vadd.f32 %v485, %v631
        %v633 = vpop.f32.mrb[0].mxu0
        %v634 = vadd.f32 %v489, %v633
        %635 = vmatprep.mubr.f32.mxu0 0.0
        %636 = vmatmul.mubr.f32.gmra.mrb[0].mxu0 %v509
        %v637 = vpop.f32.mrb[0].mxu0
        %v638 = vadd.f32 %v485, %v637
        %v639 = vpop.f32.mrb[0].mxu0
        %v640 = vadd.f32 %v489, %v639
        %641 = vmatprep.mubr.f32.mxu0 0.0
        %642 = vmatmul.mubr.f32.gmra.mrb[0].mxu0 %v512
        %v643 = vpop.f32.mrb[0].mxu0
        %v644 = vadd.f32 %v485, %v643
        %v645 = vpop.f32.mrb[0].mxu0
        %v646 = vadd.f32 %v489, %v645
        %647 = vmatprep.mubr.f32.mxu0 0.0
        %648 = vmatmul.mubr.f32.gmra.mrb[0].mxu0 %v515
        %v649 = vpop.f32.mrb[0].mxu0
        %v650 = vadd.f32 %v485, %v649
        %v651 = vpop.f32.mrb[0].mxu0
        %v652 = vadd.f32 %v489, %v651
        %653 = vmatprep.mubr.f32.mxu0 0.0
        %654 = vmatmul.mubr.f32.gmra.mrb[0].mxu0 %v518
        %v655 = vpop.f32.mrb[0].mxu0
        %v656 = vadd.f32 %v485, %v655
        %v657 = vpop.f32.mrb[0].mxu0
        %v658 = vadd.f32 %v489, %v657
        %659 = vmatprep.mubr.f32.mxu0 0.0
        %660 = vmatmul.mubr.f32.gmra.mrb[0].mxu0 %v521
        %v661 = vpop.f32.mrb[0].mxu0
        %v662 = vadd.f32 %v485, %v661
        %v663 = vpop.f32.mrb[0].mxu0
        %v664 = vadd.f32 %v489, %v663
        %665 = vmatprep.mubr.f32.mxu0 0.0
        %666 = vmatmul.mubr.f32.gmra.mrb[0].mxu0 %v524
        %v667 = vpop.f32.mrb[0].mxu0
        %v668 = vadd.f32 %v485, %v667
        %v669 = vpop.f32.mrb[0].mxu0
        %v670 = vadd.f32 %v489, %v669
        %671 = vmatprep.mubr.f32.mxu0 0.0
        %672 = vmatmul.mubr.f32.gmra.mrb[0].mxu0 %v527
        %v673 = vpop.f32.mrb[0].mxu0
        %v674 = vadd.f32 %v485, %v673
        %v675 = vpop.f32.mrb[0].mxu0
        %v676 = vadd.f32 %v489, %v675
        %677 = vmatprep.mubr.f32.mxu0 0.0
        %678 = vmatmul.mubr.f32.gmra.mrb[0].mxu0 %v530
        %v679 = vpop.f32.mrb[0].mxu0
        %v680 = vadd.f32 %v485, %v679
        %v681 = vpop.f32.mrb[0].mxu0
        %v682 = vadd.f32 %v489, %v681
        %683 = vmatprep.mubr.f32.mxu0 0.0
        %684 = vmatmul.mubr.f32.gmra.mrb[0].mxu0 %v533
        %v685 = vpop.f32.mrb[0].mxu0
        %v686 = vadd.f32 %v485, %v685
        %v687 = vpop.f32.mrb[0].mxu0
        %v688 = vadd.f32 %v489, %v687
        %689 = vmatprep.mubr.f32.mxu0 0.0
        %690 = vmatmul.mubr.f32.gmra.mrb[0].mxu0 %v536
        %v691 = vpop.f32.mrb[0].mxu0
        %v692 = vadd.f32 %v485, %v691
        %v693 = vpop.f32.mrb[0].mxu0
        %v694 = vadd.f32 %v489, %v693
        %695 = vmatprep.mubr.f32.mxu0 0.0
        %696 = vmatmul.mubr.f32.gmra.mrb[0].mxu0 %v539
        %v697 = vpop.f32.mrb[0].mxu0
        %v698 = vadd.f32 %v485, %v697
        %v699 = vpop.f32.mrb[0].mxu0
        %v700 = vadd.f32 %v489, %v699
        %701 = vdwg.mxu0
        %702 = vst [vmem:[%s254] sm:$0xff] %v608
        %vm703 = vcmask 130048
        %704 = vst.msk [vmem:[%s254 + $0x8] sm:$0xff] %vm703, %v610
        %705 = vst [vmem:[%s254 + $0x10] sm:$0xff] %v614
        %706 = vst.msk [vmem:[%s254 + $0x18] sm:$0xff] %vm703, %v616
        %707 = vst [vmem:[%s254 + $0x20] sm:$0xff] %v620
        %708 = vst.msk [vmem:[%s254 + $0x28] sm:$0xff] %vm703, %v622
        %709 = vst [vmem:[%s254 + $0x30] sm:$0xff] %v626
        %710 = vst.msk [vmem:[%s254 + $0x38] sm:$0xff] %vm703, %v628
        %711 = vst [vmem:[%s254 + $0x40] sm:$0xff] %v632
        %712 = vst.msk [vmem:[%s254 + $0x48] sm:$0xff] %vm703, %v634
        %713 = vst [vmem:[%s254 + $0x50] sm:$0xff] %v638
        %714 = vst.msk [vmem:[%s254 + $0x58] sm:$0xff] %vm703, %v640
        %715 = vst [vmem:[%s254 + $0x60] sm:$0xff] %v644
        %716 = vst.msk [vmem:[%s254 + $0x68] sm:$0xff] %vm703, %v646
        %717 = vst [vmem:[%s254 + $0x70] sm:$0xff] %v650
        %718 = vst.msk [vmem:[%s254 + $0x78] sm:$0xff] %vm703, %v652
        %719 = vst [vmem:[%s254 + $0x80] sm:$0xff] %v656
        %720 = vst.msk [vmem:[%s254 + $0x88] sm:$0xff] %vm703, %v658
        %721 = vst [vmem:[%s254 + $0x90] sm:$0xff] %v662
        %722 = vst.msk [vmem:[%s254 + $0x98] sm:$0xff] %vm703, %v664
        %723 = vst [vmem:[%s254 + $0xa0] sm:$0xff] %v668
        %724 = vst.msk [vmem:[%s254 + $0xa8] sm:$0xff] %vm703, %v670
        %725 = vst [vmem:[%s254 + $0xb0] sm:$0xff] %v674
        %726 = vst.msk [vmem:[%s254 + $0xb8] sm:$0xff] %vm703, %v676
        %727 = vst [vmem:[%s254 + $0xc0] sm:$0xff] %v680
        %728 = vst.msk [vmem:[%s254 + $0xc8] sm:$0xff] %vm703, %v682
        %729 = vst [vmem:[%s254 + $0xd0] sm:$0xff] %v686
        %730 = vst.msk [vmem:[%s254 + $0xd8] sm:$0xff] %vm703, %v688
        %731 = vst [vmem:[%s254 + $0xe0] sm:$0xff] %v692
        %732 = vst.msk [vmem:[%s254 + $0xe8] sm:$0xff] %vm703, %v694
        %733 = vst [vmem:[%s254 + $0xf0] sm:$0xff] %v698
        %734 = vst.msk [vmem:[%s254 + $0xf8] sm:$0xff] %vm703, %v700
        %s735 = smul.u32 16, %s18
        %p736 = scmp.lt.s32.totalorder %s735, 31
        %s737 = scalar_select %p736, %s735, 31
        %s738 = smul.addr %s737, 2
        %s739 = smul.addr %s738, 8
        %s740 = scalar_lea.vmem %s5, %s739
        // Predicated region
        $region49: #{_fwd.1} parent=39 // pred_check
          %p741 = pneg %p146
        $region50: #{_fwd.1} parent=39 // pred_check_branch
          %743 = sbr.rel (%p741) target = $region52
        $region51: #{_fwd.1} parent=39 // pred_region
          %s744 = smul.u32 16, %s18
        $region52: #{_fwd.1} parent=39 // pred_fallthru
          _
      $region40: #{_fwd.1} parent=5 // pred_fallthru
        _
      %p745 = scmp.le.s32.totalorder 2, %s13
      // Predicated region
      $region53: #{_fwd.1} parent=5 // pred_check
        %p746 = pneg %p745
      $region54: #{_fwd.1} parent=5 // pred_check_branch
        %748 = sbr.rel (%p746) target = $region56
      $region55: #{_fwd.1} parent=5 // pred_region
        %s749 = ssub.s32 %s13, 2
        // Predicated region
        $region57: #{_fwd.1} parent=55 // pred_check
          %p750 = pneg %p152
        $region58: #{_fwd.1} parent=55 // pred_check_branch
          %752 = sbr.rel (%p750) target = $region60
        $region59: #{_fwd.1} parent=55 // pred_region
          %s753 = smul.u32 16, %s19
          %p754 = scmp.lt.s32.totalorder %s753, 31
          %s755 = scalar_select %p754, %s753, 31
          %s756 = smul.addr %s755, 2
          %s757 = smul.addr %s756, 8
          %s758 = scalar_lea.vmem %s5, %s757
        $region60: #{_fwd.1} parent=55 // pred_fallthru
          _
      $region56: #{_fwd.1} parent=5 // pred_fallthru
        _
    $region6: #{_fwd.1} parent=1 // loop_footer
      %s17 = sadd.s32 1, %s13
    $region7: #{_fwd.1} parent=1 // loop_footer_branch
      %12 = sbr.rel target = $region3
    $region8: #{_fwd.1} parent=1 // loop_exit
      _
    %759 = vsyncpa [#allocation3], 1
    %s760 = scalar_lea.sflag [#allocation3], 1
    %761 = vsyncpa %s760, 1
    %762 = vsyncpa [#allocation5], 1

</llo_original>
